<compile_context>
chip_gen: v5e
topology: v5e:2x2
jax: 0.10.0
libtpu: 0.0.40
codegen_flags: <defaults>
</compile_context>

<pallas_src>
import functools

import jax
import jax.numpy as jnp
from jax.experimental import pallas as pl
from jax.experimental.pallas import tpu as pltpu


def _default_lane_target():
    """Per-generation MXU lane target: 256 for v6e/v7x (2x256x256 MXU), else 128."""
    try:
        kind = jax.devices()[0].device_kind.lower()
    except Exception:
        return 128
    if "v6" in kind or "v7" in kind:
        return 256
    return 128


def _choose_tile_b(b, dim_out, lane_target):
    """Smallest tile_b reaching the lane target.

    Keeping tile_b minimal bounds the kron(I_tb, W) FLOP/byte inflation and
    maximizes the number of grid steps (both v7x TensorCores get work when the
    batch allows). Falls back to the 128-lane floor if the wider per-generation
    target would collapse the grid to a single step while 128 lanes would not.
    """
    t_floor = max(1, pl.cdiv(128, dim_out))          # lane-dense floor (unmasked vst)
    t_tgt = max(1, pl.cdiv(lane_target, dim_out))    # per-generation MXU target
    if pl.cdiv(b, t_tgt) >= 2 or pl.cdiv(b, t_floor) < 2:
        return t_tgt
    return t_floor


def make_cheb_conv_kernel(cheb_k):
    def kernel(x_ref, w_ref, s_ref, bias_ref, o_ref):
        # x_ref   : (1, n_pad, tile_b*dim_in)            operand dtype, batch-minor lanes
        # w_ref   : (cheb_k, tile_b*dim_in, tile_b*dim_out)  kron(I_tb, W1@W2[k])
        # s_ref   : (cheb_k, n_pad, n_pad)                   graph supports
        # bias_ref: (n_pad, tile_b*dim_out)                  f32 folded bias
        # o_ref   : (1, n_pad, tile_b*dim_out)               lane-dense output block
        x_wide = x_ref[0]                                  # (n_pad, tb*din)
        acc = bias_ref[...]                                # f32 accumulator (in vregs)
        for kk in range(cheb_k):                           # small static unroll
            # hw_k = x_b @ Wk' for every batch lane-block, f32 accumulation.
            hw_k = jnp.dot(x_wide, w_ref[kk],
                           preferred_element_type=jnp.float32)   # (n_pad, tb*dout)
            # acc += S_k @ hw_k  (accumulated across k in f32; no VMEM scratch).
            acc = acc + jnp.dot(s_ref[kk], hw_k.astype(s_ref.dtype),
                                preferred_element_type=jnp.float32)
        o_ref[0] = acc.astype(o_ref.dtype)

    return kernel


def _vmem_estimate_bytes(cheb_k, n_pad, tbdi, tbdo, op_bytes, out_bytes):
    fixed = (cheb_k * n_pad * n_pad * op_bytes          # supports (grid-invariant)
             + cheb_k * tbdi * tbdo * op_bytes          # folded block-diag weights
             + n_pad * tbdo * 4)                        # f32 bias
    streamed = 2 * (n_pad * tbdi * op_bytes             # x tile, double-buffered
                    + n_pad * tbdo * out_bytes)         # out tile, double-buffered
    return fixed + streamed


@functools.partial(jax.jit,
                   static_argnames=("tile_b", "lane_target", "operand_dtype"))
def cheb_conv_forward(x, supports, w1, b1, w2, b2,
                      tile_b=None, lane_target=None,
                      operand_dtype=jnp.bfloat16):
    """x: (b, n, dim_in), supports: (cheb_k, n, n),
       w1: (dim_in, dim_out), b1: (dim_out,),
       w2: (cheb_k, dim_out, dim_out)  [k-major split of gconv weight], b2: (dim_out,).

       operand_dtype: MXU operand dtype (f32 accumulation always). Use
       jnp.float32 if the bf16 rounding of HW/supports matters at large n.
    """
    b, n, dim_in = x.shape
    cheb_k = supports.shape[0]
    dim_out = w1.shape[1]

    if lane_target is None:
        lane_target = _default_lane_target()
    if tile_b is None:
        tile_b = _choose_tile_b(b, dim_out, lane_target)

    num_tiles = pl.cdiv(b, tile_b)
    padded_b = num_tiles * tile_b
    n_pad = pl.cdiv(n, 8) * 8          # sublane alignment for arbitrary graph sizes
    tbdi = tile_b * dim_in
    tbdo = tile_b * dim_out
    op = operand_dtype

    # --- wrapper-side prep (fused & cached by jit; weights can be pre-folded
    #     once and reused across calls if desired) -----------------------------
    # Fold W1/b1 into per-k weights and a per-node bias (all in f32).
    wk_prime = jnp.einsum('io,koc->kic', w1.astype(jnp.float32),
                          w2.astype(jnp.float32))            # (k, dim_in, dim_out)
    bk_prime = jnp.einsum('o,koc->kc', b1.astype(jnp.float32),
                          w2.astype(jnp.float32))            # (k, dim_out)

    s_pad = jnp.pad(supports.astype(jnp.float32),
                    ((0, 0), (0, n_pad - n), (0, n_pad - n)))
    bias_full = b2.astype(jnp.float32)[None, :] + \
        jnp.einsum('kmn,kc->mc', s_pad, bk_prime)            # (n_pad, dim_out)
    bias_tile = jnp.tile(bias_full, (1, tile_b))             # (n_pad, tb*dout), f32

    # Block-diagonal per-k weights so the per-batch Linear acts directly on the
    # (rows, tile_b*channels) lane layout. tile_b is kept minimal (lane-dense
    # floor) so the kron inflation stays bounded.
    eye_tb = jnp.eye(tile_b, dtype=jnp.float32)
    w_bd = jnp.stack([jnp.kron(eye_tb, wk_prime[k]) for k in range(cheb_k)],
                     axis=0).astype(op)                      # (k, tb*din, tb*dout)

    # Batch-tiled, batch-minor-lane input: (num_tiles, n_pad, tile_b*dim_in).
    x_p = jnp.pad(x, ((0, padded_b - b), (0, n_pad - n), (0, 0)))
    x_tiles = (x_p.reshape(num_tiles, tile_b, n_pad, dim_in)
                 .transpose(0, 2, 1, 3)
                 .reshape(num_tiles, n_pad, tbdi)).astype(op)

    s_op = s_pad.astype(op)                                  # (k, n_pad, n_pad)

    # --- VMEM budget: keep the default scoped limit unless the estimate needs
    #     more; never request the full physical VMEM of a v7x TensorCore. ------
    est = _vmem_estimate_bytes(cheb_k, n_pad, tbdi, tbdo,
                               jnp.dtype(op).itemsize, jnp.dtype(x.dtype).itemsize)
    compiler_kwargs = dict(dimension_semantics=("parallel",))
    if est > 24 * 1024 * 1024:
        # TODO(synk): beyond this, row-tile the supports over a second grid axis.
        compiler_kwargs["vmem_limit_bytes"] = int(min(2 * est, 48 * 1024 * 1024))

    kernel = make_cheb_conv_kernel(cheb_k)

    out_tiles = pl.pallas_call(
        kernel,
        out_shape=jax.ShapeDtypeStruct((num_tiles, n_pad, tbdo), x.dtype),
        grid_spec=pltpu.PrefetchScalarGridSpec(
            num_scalar_prefetch=0,
            grid=(num_tiles,),
            in_specs=[
                pl.BlockSpec((1, n_pad, tbdi), lambda i: (i, 0, 0)),
                pl.BlockSpec((cheb_k, tbdi, tbdo), lambda i: (0, 0, 0)),
                pl.BlockSpec((cheb_k, n_pad, n_pad), lambda i: (0, 0, 0)),
                pl.BlockSpec((n_pad, tbdo), lambda i: (0, 0)),
            ],
            out_specs=pl.BlockSpec((1, n_pad, tbdo), lambda i: (i, 0, 0)),
        ),
        compiler_params=pltpu.CompilerParams(**compiler_kwargs),
    )(x_tiles, w_bd, s_op, bias_tile)

    # Un-tile the lane-dense output back to (b, n, dim_out).
    out = (out_tiles.reshape(num_tiles, n_pad, tile_b, dim_out)
             .transpose(0, 2, 1, 3)
             .reshape(padded_b, n_pad, dim_out)[:b, :n])
    return out


def cheb_conv_reference(x, supports, w1, b1, w2, b2):
    """Pure-JAX (f32) mirror of the PyTorch forward, for validation."""
    b, n, _ = x.shape
    cheb_k, dim_out = w2.shape[0], w2.shape[2]
    h = x @ w1 + b1                                          # init_gconv
    x_g1 = jnp.einsum('knm,bmc->bknc', supports, h)
    x_g1 = jnp.transpose(x_g1, (0, 2, 1, 3)).reshape(b, n, cheb_k * dim_out)
    w2_flat = w2.reshape(cheb_k * dim_out, dim_out)          # k-major rows
    return x_g1 @ w2_flat + b2                               # gconv


if __name__ == "__main__":
    # Small, deterministic problem: batch=2, nodes=16, dim_in=4, dim_out=32, cheb_k=3
    b, n, dim_in, dim_out, cheb_k = 2, 16, 4, 32, 3

    key = jax.random.PRNGKey(0)
    kx, ks, kw1, kb1, kw2, kb2 = jax.random.split(key, 6)

    x = jax.random.normal(kx, (b, n, dim_in), dtype=jnp.float32)
    supports = jax.random.normal(ks, (cheb_k, n, n), dtype=jnp.float32)

    # Parameters (shapes from the nn.Linear defs in __init__):
    #   init_gconv: Linear(dim_in, dim_out)          -> w1 (dim_in, dim_out), b1 (dim_out,)
    #   gconv:      Linear(dim_out*cheb_k, dim_out)  -> w2 stored split per k (k-major).
    w1 = jax.random.normal(kw1, (dim_in, dim_out), dtype=jnp.float32) * 0.1
    b1 = jax.random.normal(kb1, (dim_out,), dtype=jnp.float32) * 0.1
    w2 = jax.random.normal(kw2, (cheb_k, dim_out, dim_out), dtype=jnp.float32) * 0.1
    b2 = jax.random.normal(kb2, (dim_out,), dtype=jnp.float32) * 0.1

    out = cheb_conv_forward(x, supports, w1, b1, w2, b2)
    out = jax.block_until_ready(out)

    ref = cheb_conv_reference(x, supports, w1, b1, w2, b2)
    assert out.shape == (b, n, dim_out)
    # bf16 MXU operands with f32 accumulation -> compare with a looser tolerance.
    assert jnp.allclose(out, ref, atol=5e-2, rtol=5e-2), "mismatch vs reference"

    print("KERNEL_OK")
</pallas_src>

<mosaic_0001>
module attributes {stable_mosaic.version = 11 : i64} {
  func.func @kernel(%arg0: i32, %arg1: memref<1x16x16xbf16, #tpu.memory_space<vmem>>, %arg2: memref<3x16x128xbf16, #tpu.memory_space<vmem>>, %arg3: memref<3x16x16xbf16, #tpu.memory_space<vmem>>, %arg4: memref<16x128xf32, #tpu.memory_space<vmem>>, %arg5: memref<1x16x128xf32, #tpu.memory_space<vmem>>) attributes {dimension_semantics = [#tpu.dimension_semantics<parallel>], iteration_bounds = array<i64: 1>, scalar_prefetch = 0 : i64, scratch_operands = 0 : i64, tpu.core_type = #tpu.core_type<tc>, window_params = [{transform_indices = @transform_0, window_bounds = array<i64: 1, 16, 16>}, {pipeline_mode = #tpu.pipeline_mode<synchronous>, transform_indices = @transform_1, window_bounds = array<i64: 3, 16, 128>}, {pipeline_mode = #tpu.pipeline_mode<synchronous>, transform_indices = @transform_2, window_bounds = array<i64: 3, 16, 16>}, {pipeline_mode = #tpu.pipeline_mode<synchronous>, transform_indices = @transform_3, window_bounds = array<i64: 16, 128>}, {transform_indices = @transform_4, window_bounds = array<i64: 1, 16, 128>}]} {
    %c0 = arith.constant 0 : index
    %c0_0 = arith.constant 0 : index
    %c0_1 = arith.constant 0 : index
    %0 = vector.load %arg1[%c0, %c0_0, %c0_1] : memref<1x16x16xbf16, #tpu.memory_space<vmem>>, vector<1x16x16xbf16>
    %1 = vector.shape_cast %0 : vector<1x16x16xbf16> to vector<16x16xbf16>
    %c0_2 = arith.constant 0 : index
    %c0_3 = arith.constant 0 : index
    %2 = vector.load %arg4[%c0_2, %c0_3] : memref<16x128xf32, #tpu.memory_space<vmem>>, vector<16x128xf32>
    %c0_4 = arith.constant 0 : index
    %c0_5 = arith.constant 0 : index
    %c0_6 = arith.constant 0 : index
    %3 = vector.load %arg2[%c0_4, %c0_5, %c0_6] : memref<3x16x128xbf16, #tpu.memory_space<vmem>>, vector<1x16x128xbf16>
    %4 = vector.shape_cast %3 : vector<1x16x128xbf16> to vector<16x128xbf16>
    %cst = arith.constant dense<0.000000e+00> : vector<16x128xf32>
    %5 = tpu.matmul %1, %4, %cst {dimension_numbers = #tpu.dot_dimension_numbers<[1], [0], [0], [1], [0, 0, 1, 1], [], []>} : vector<16x16xbf16>, vector<16x128xbf16>, vector<16x128xf32> -> vector<16x128xf32>
    %c0_7 = arith.constant 0 : index
    %c0_8 = arith.constant 0 : index
    %c0_9 = arith.constant 0 : index
    %6 = vector.load %arg3[%c0_7, %c0_8, %c0_9] : memref<3x16x16xbf16, #tpu.memory_space<vmem>>, vector<1x16x16xbf16>
    %7 = vector.shape_cast %6 : vector<1x16x16xbf16> to vector<16x16xbf16>
    %8 = arith.truncf %5 : vector<16x128xf32> to vector<16x128xbf16>
    %cst_10 = arith.constant dense<0.000000e+00> : vector<16x128xf32>
    %9 = tpu.matmul %7, %8, %cst_10 {dimension_numbers = #tpu.dot_dimension_numbers<[1], [0], [0], [1], [0, 0, 1, 1], [], []>} : vector<16x16xbf16>, vector<16x128xbf16>, vector<16x128xf32> -> vector<16x128xf32>
    %10 = arith.addf %2, %9 : vector<16x128xf32>
    %c1 = arith.constant 1 : index
    %c0_11 = arith.constant 0 : index
    %c0_12 = arith.constant 0 : index
    %11 = vector.load %arg2[%c1, %c0_11, %c0_12] : memref<3x16x128xbf16, #tpu.memory_space<vmem>>, vector<1x16x128xbf16>
    %12 = vector.shape_cast %11 : vector<1x16x128xbf16> to vector<16x128xbf16>
    %cst_13 = arith.constant dense<0.000000e+00> : vector<16x128xf32>
    %13 = tpu.matmul %1, %12, %cst_13 {dimension_numbers = #tpu.dot_dimension_numbers<[1], [0], [0], [1], [0, 0, 1, 1], [], []>} : vector<16x16xbf16>, vector<16x128xbf16>, vector<16x128xf32> -> vector<16x128xf32>
    %c1_14 = arith.constant 1 : index
    %c0_15 = arith.constant 0 : index
    %c0_16 = arith.constant 0 : index
    %14 = vector.load %arg3[%c1_14, %c0_15, %c0_16] : memref<3x16x16xbf16, #tpu.memory_space<vmem>>, vector<1x16x16xbf16>
    %15 = vector.shape_cast %14 : vector<1x16x16xbf16> to vector<16x16xbf16>
    %16 = arith.truncf %13 : vector<16x128xf32> to vector<16x128xbf16>
    %cst_17 = arith.constant dense<0.000000e+00> : vector<16x128xf32>
    %17 = tpu.matmul %15, %16, %cst_17 {dimension_numbers = #tpu.dot_dimension_numbers<[1], [0], [0], [1], [0, 0, 1, 1], [], []>} : vector<16x16xbf16>, vector<16x128xbf16>, vector<16x128xf32> -> vector<16x128xf32>
    %18 = arith.addf %10, %17 : vector<16x128xf32>
    %c2 = arith.constant 2 : index
    %c0_18 = arith.constant 0 : index
    %c0_19 = arith.constant 0 : index
    %19 = vector.load %arg2[%c2, %c0_18, %c0_19] : memref<3x16x128xbf16, #tpu.memory_space<vmem>>, vector<1x16x128xbf16>
    %20 = vector.shape_cast %19 : vector<1x16x128xbf16> to vector<16x128xbf16>
    %cst_20 = arith.constant dense<0.000000e+00> : vector<16x128xf32>
    %21 = tpu.matmul %1, %20, %cst_20 {dimension_numbers = #tpu.dot_dimension_numbers<[1], [0], [0], [1], [0, 0, 1, 1], [], []>} : vector<16x16xbf16>, vector<16x128xbf16>, vector<16x128xf32> -> vector<16x128xf32>
    %c2_21 = arith.constant 2 : index
    %c0_22 = arith.constant 0 : index
    %c0_23 = arith.constant 0 : index
    %22 = vector.load %arg3[%c2_21, %c0_22, %c0_23] : memref<3x16x16xbf16, #tpu.memory_space<vmem>>, vector<1x16x16xbf16>
    %23 = vector.shape_cast %22 : vector<1x16x16xbf16> to vector<16x16xbf16>
    %24 = arith.truncf %21 : vector<16x128xf32> to vector<16x128xbf16>
    %cst_24 = arith.constant dense<0.000000e+00> : vector<16x128xf32>
    %25 = tpu.matmul %23, %24, %cst_24 {dimension_numbers = #tpu.dot_dimension_numbers<[1], [0], [0], [1], [0, 0, 1, 1], [], []>} : vector<16x16xbf16>, vector<16x128xbf16>, vector<16x128xf32> -> vector<16x128xf32>
    %26 = arith.addf %18, %25 : vector<16x128xf32>
    %c0_25 = arith.constant 0 : index
    %c0_26 = arith.constant 0 : index
    %c0_27 = arith.constant 0 : index
    %27 = vector.load %arg5[%c0_25, %c0_26, %c0_27] : memref<1x16x128xf32, #tpu.memory_space<vmem>>, vector<1x16x128xf32>
    %28 = vector.shape_cast %27 : vector<1x16x128xf32> to vector<16x128xf32>
    %29 = vector.shape_cast %26 : vector<16x128xf32> to vector<1x16x128xf32>
    tpu.vector_store %arg5[%c0_25, %c0_26, %c0_27], %29 {strides = array<i32>} : memref<1x16x128xf32, #tpu.memory_space<vmem>>, vector<1x16x128xf32>,
    return
  }
  func.func @transform_0(%arg0: i32) -> (i32, i32, i32) {
    %c0_i32 = arith.constant 0 : i32
    %c0_i32_0 = arith.constant 0 : i32
    %c0_i32_1 = arith.constant 0 : i32
    return %arg0, %c0_i32, %c0_i32_0 : i32, i32, i32
  }
  func.func @transform_1(%arg0: i32) -> (i32, i32, i32) {
    %c0_i32 = arith.constant 0 : i32
    %c0_i32_0 = arith.constant 0 : i32
    %c0_i32_1 = arith.constant 0 : i32
    %c0_i32_2 = arith.constant 0 : i32
    return %c0_i32, %c0_i32_0, %c0_i32_1 : i32, i32, i32
  }
  func.func @transform_2(%arg0: i32) -> (i32, i32, i32) {
    %c0_i32 = arith.constant 0 : i32
    %c0_i32_0 = arith.constant 0 : i32
    %c0_i32_1 = arith.constant 0 : i32
    %c0_i32_2 = arith.constant 0 : i32
    return %c0_i32, %c0_i32_0, %c0_i32_1 : i32, i32, i32
  }
  func.func @transform_3(%arg0: i32) -> (i32, i32) {
    %c0_i32 = arith.constant 0 : i32
    %c0_i32_0 = arith.constant 0 : i32
    %c0_i32_1 = arith.constant 0 : i32
    return %c0_i32, %c0_i32_0 : i32, i32
  }
  func.func @transform_4(%arg0: i32) -> (i32, i32, i32) {
    %c0_i32 = arith.constant 0 : i32
    %c0_i32_0 = arith.constant 0 : i32
    %c0_i32_1 = arith.constant 0 : i32
    return %arg0, %c0_i32, %c0_i32_0 : i32, i32, i32
  }
}

</mosaic_0001>

<llo_original>
// kernel: tile.9
$region0: #{tile.9}
  %s0 = inlined_call_operand.vmem [shape: f32[16,4,32], index: 0, kind: input, shape index: {}]
  %s1 = inlined_call_operand.vmem [shape: f32[16,128], index: 1, kind: output, shape index: {}]
  $region1: #{tile.9} parent=0
    #allocation0 [shape = 'u8[65536]{0}', space=vmem, size = 0x10000, scoped, tag = 'scoped mem for input reshape']
    %s3 = ssub.s32 16, 1
    %s4 = scalar_lea.vmem %s0, 60
    %v5 = vld [vmem:[%s4] sm:%s3]
    %s6 = scalar_lea.vmem [#allocation0], 120
    %7 = vst [vmem:[%s6] sm:%s3] %v5
    %s8 = scalar_lea.vmem %s0, 56
    %v9 = vld [vmem:[%s8] sm:%s3]
    %s10 = scalar_lea.vmem [#allocation0], 112
    %11 = vst [vmem:[%s10] sm:%s3] %v9
    %s12 = scalar_lea.vmem %s0, 52
    %v13 = vld [vmem:[%s12] sm:%s3]
    %s14 = scalar_lea.vmem [#allocation0], 104
    %15 = vst [vmem:[%s14] sm:%s3] %v13
    %s16 = scalar_lea.vmem %s0, 48
    %v17 = vld [vmem:[%s16] sm:%s3]
    %s18 = scalar_lea.vmem [#allocation0], 96
    %19 = vst [vmem:[%s18] sm:%s3] %v17
    %s20 = scalar_lea.vmem %s0, 44
    %v21 = vld [vmem:[%s20] sm:%s3]
    %s22 = scalar_lea.vmem [#allocation0], 88
    %23 = vst [vmem:[%s22] sm:%s3] %v21
    %s24 = scalar_lea.vmem %s0, 40
    %v25 = vld [vmem:[%s24] sm:%s3]
    %s26 = scalar_lea.vmem [#allocation0], 80
    %27 = vst [vmem:[%s26] sm:%s3] %v25
    %s28 = scalar_lea.vmem %s0, 36
    %v29 = vld [vmem:[%s28] sm:%s3]
    %s30 = scalar_lea.vmem [#allocation0], 72
    %31 = vst [vmem:[%s30] sm:%s3] %v29
    %s32 = scalar_lea.vmem %s0, 32
    %v33 = vld [vmem:[%s32] sm:%s3]
    %s34 = scalar_lea.vmem [#allocation0], 64
    %35 = vst [vmem:[%s34] sm:%s3] %v33
    %s36 = scalar_lea.vmem %s0, 28
    %v37 = vld [vmem:[%s36] sm:%s3]
    %s38 = scalar_lea.vmem [#allocation0], 56
    %39 = vst [vmem:[%s38] sm:%s3] %v37
    %s40 = scalar_lea.vmem %s0, 24
    %v41 = vld [vmem:[%s40] sm:%s3]
    %s42 = scalar_lea.vmem [#allocation0], 48
    %43 = vst [vmem:[%s42] sm:%s3] %v41
    %s44 = scalar_lea.vmem %s0, 20
    %v45 = vld [vmem:[%s44] sm:%s3]
    %s46 = scalar_lea.vmem [#allocation0], 40
    %47 = vst [vmem:[%s46] sm:%s3] %v45
    %s48 = scalar_lea.vmem %s0, 16
    %v49 = vld [vmem:[%s48] sm:%s3]
    %s50 = scalar_lea.vmem [#allocation0], 32
    %51 = vst [vmem:[%s50] sm:%s3] %v49
    %s52 = scalar_lea.vmem %s0, 12
    %v53 = vld [vmem:[%s52] sm:%s3]
    %s54 = scalar_lea.vmem [#allocation0], 24
    %55 = vst [vmem:[%s54] sm:%s3] %v53
    %s56 = scalar_lea.vmem %s0, 8
    %v57 = vld [vmem:[%s56] sm:%s3]
    %s58 = scalar_lea.vmem [#allocation0], 16
    %59 = vst [vmem:[%s58] sm:%s3] %v57
    %s60 = scalar_lea.vmem %s0, 4
    %v61 = vld [vmem:[%s60] sm:%s3]
    %s62 = scalar_lea.vmem [#allocation0], 8
    %63 = vst [vmem:[%s62] sm:%s3] %v61
    %v64 = vld [vmem:[%s0] sm:%s3]
    %65 = vst [vmem:[#allocation0] sm:%s3] %v64
    %v66 = vld [vmem:[#allocation0] ss:$8 sm:$0xf]
    %v67 = vld [vmem:[#allocation0] ss:$8 sm:$0xf0]
    %vm68 = vcmask 1047556
    %v69 = vsel %vm68, %v67, %v66
    %vm70 = vcmask 261120
    %71 = vst.msk [vmem:[%s1] sm:$0xff] %vm70, %v69
    %s72 = scalar_lea.vmem [#allocation0], 64
    %v73 = vld [vmem:[%s72] ss:$8 sm:$0xf]
    %s74 = scalar_lea.vmem [#allocation0], 64
    %v75 = vld [vmem:[%s74] ss:$8 sm:$0xf0]
    %vm76 = vcmask 1047556
    %v77 = vsel %vm76, %v75, %v73
    %vm78 = vcmask 261120
    %s79 = scalar_lea.vmem %s1, 8
    %80 = vst.msk [vmem:[%s79] sm:$0xff] %vm78, %v77
    %s81 = scalar_lea.vmem [#allocation0], 3
    %v82 = vld [vmem:[%s81] ss:$8 sm:$0xf]
    %s83 = scalar_lea.vmem [#allocation0], 3
    %v84 = vld [vmem:[%s83] ss:$8 sm:$0xf0]
    %vm85 = vcmask 1047556
    %v86 = vsel %vm85, %v84, %v82
    %87 = vrot.lane.b32.xlu0 %v86, 96
    %v88 = vpop.permute.xlu0 %87
    %vm89 = vcmask 1048320
    %90 = vst.msk [vmem:[%s1] sm:$0xff] %vm89, %v88
    %s91 = scalar_lea.vmem [#allocation0], 67
    %v92 = vld [vmem:[%s91] ss:$8 sm:$0xf]
    %s93 = scalar_lea.vmem [#allocation0], 67
    %v94 = vld [vmem:[%s93] ss:$8 sm:$0xf0]
    %vm95 = vcmask 1047556
    %v96 = vsel %vm95, %v94, %v92
    %97 = vrot.lane.b32.xlu0 %v96, 96
    %v98 = vpop.permute.xlu0 %97
    %vm99 = vcmask 1048320
    %s100 = scalar_lea.vmem %s1, 8
    %101 = vst.msk [vmem:[%s100] sm:$0xff] %vm99, %v98
    %s102 = scalar_lea.vmem [#allocation0], 2
    %v103 = vld [vmem:[%s102] ss:$8 sm:$0xf]
    %s104 = scalar_lea.vmem [#allocation0], 2
    %v105 = vld [vmem:[%s104] ss:$8 sm:$0xf0]
    %vm106 = vcmask 1047556
    %v107 = vsel %vm106, %v105, %v103
    %108 = vrot.lane.b32.xlu0 %v107, 64
    %v109 = vpop.permute.xlu0 %108
    %vm110 = vcmask 785920
    %111 = vst.msk [vmem:[%s1] sm:$0xff] %vm110, %v109
    %s112 = scalar_lea.vmem [#allocation0], 66
    %v113 = vld [vmem:[%s112] ss:$8 sm:$0xf]
    %s114 = scalar_lea.vmem [#allocation0], 66
    %v115 = vld [vmem:[%s114] ss:$8 sm:$0xf0]
    %vm116 = vcmask 1047556
    %v117 = vsel %vm116, %v115, %v113
    %118 = vrot.lane.b32.xlu0 %v117, 64
    %v119 = vpop.permute.xlu0 %118
    %vm120 = vcmask 785920
    %s121 = scalar_lea.vmem %s1, 8
    %122 = vst.msk [vmem:[%s121] sm:$0xff] %vm120, %v119
    %s123 = scalar_lea.vmem [#allocation0], 1
    %v124 = vld [vmem:[%s123] ss:$8 sm:$0xf]
    %s125 = scalar_lea.vmem [#allocation0], 1
    %v126 = vld [vmem:[%s125] ss:$8 sm:$0xf0]
    %vm127 = vcmask 1047556
    %v128 = vsel %vm127, %v126, %v124
    %129 = vrot.lane.b32.xlu0 %v128, 32
    %v130 = vpop.permute.xlu0 %129
    %vm131 = vcmask 523520
    %132 = vst.msk [vmem:[%s1] sm:$0xff] %vm131, %v130
    %s133 = scalar_lea.vmem [#allocation0], 65
    %v134 = vld [vmem:[%s133] ss:$8 sm:$0xf]
    %s135 = scalar_lea.vmem [#allocation0], 65
    %v136 = vld [vmem:[%s135] ss:$8 sm:$0xf0]
    %vm137 = vcmask 1047556
    %v138 = vsel %vm137, %v136, %v134
    %139 = vrot.lane.b32.xlu0 %v138, 32
    %v140 = vpop.permute.xlu0 %139
    %vm141 = vcmask 523520
    %s142 = scalar_lea.vmem %s1, 8
    %143 = vst.msk [vmem:[%s142] sm:$0xff] %vm141, %v140

// kernel: cheb_conv_forward.1
$region0: #{cheb_conv_forward.1}
  #allocation0 [shape = 'u32[]', space=smem, size = 0x4, offset = 0x4, fixed_abs, tag = 'smem constant byte address 0x4 - core index']
  #allocation1 [shape = 'u32[72,128]{1,0:T(1,128)}', space=vmem, size = 0x9000, scoped, tag = 'internal scratch']
  %s0 = inlined_call_operand.vmem [shape: bf16[1,16,16], index: 0, kind: input, shape index: {}]
  %s1 = inlined_call_operand.vmem [shape: bf16[3,16,128], index: 1, kind: input, shape index: {}]
  %s2 = inlined_call_operand.vmem [shape: bf16[3,16,16], index: 2, kind: input, shape index: {}]
  %s3 = inlined_call_operand.vmem [shape: f32[16,128], index: 3, kind: input, shape index: {}]
  %s4 = inlined_call_operand.vmem [shape: f32[1,16,128], index: 4, kind: output, shape index: {}]
  %s5 = sld [smem:[#allocation0]]
  $region26: #{cheb_conv_forward.1} parent=0
    _
  %s7 = ssub.s32 1, %s5
  %s8 = scalar_select 0, %s7, %s5
  // Predicated region
  $region2: #{cheb_conv_forward.1} parent=0 // pred_check
    _
  $region3: #{cheb_conv_forward.1} parent=0 // pred_check_branch
    %10 = sbr.rel (0) target = $region5
  $region4: #{cheb_conv_forward.1} parent=0 // pred_region
    _
  $region5: #{cheb_conv_forward.1} parent=0 // pred_fallthru
    _
  // Predicated region
  $region6: #{cheb_conv_forward.1} parent=0 // pred_check
    _
  $region7: #{cheb_conv_forward.1} parent=0 // pred_check_branch
    %12 = sbr.rel (0) target = $region9
  $region8: #{cheb_conv_forward.1} parent=0 // pred_region
    _
  $region9: #{cheb_conv_forward.1} parent=0 // pred_fallthru
    _
  // Predicated region
  $region10: #{cheb_conv_forward.1} parent=0 // pred_check
    _
  $region11: #{cheb_conv_forward.1} parent=0 // pred_check_branch
    %14 = sbr.rel (0) target = $region13
  $region12: #{cheb_conv_forward.1} parent=0 // pred_region
    _
  $region13: #{cheb_conv_forward.1} parent=0 // pred_fallthru
    _
  // Predicated region
  $region14: #{cheb_conv_forward.1} parent=0 // pred_check
    _
  $region15: #{cheb_conv_forward.1} parent=0 // pred_check_branch
    %16 = sbr.rel (0) target = $region17
  $region16: #{cheb_conv_forward.1} parent=0 // pred_region
    _
  $region17: #{cheb_conv_forward.1} parent=0 // pred_fallthru
    _
  %v18 = vld [vmem:[%s0] sm:$0xf]
  %v19 = vld [vmem:[%s0 + $0x4] sm:$0xf]
  %v20 = vld [vmem:[%s3] sm:$0xff]
  %v21 = vld [vmem:[%s3 + $0x8] sm:$0xff]
  %v22 = vld [vmem:[%s1] sm:$0xf]
  %v23 = vld [vmem:[%s1 + $0x4] sm:$0xf]
  %v26 = vunpack.c.l.b16 %v18
  %v27 = vunpack.c.l.b16 %v19
  %v28 = vpack.c.b16 %v27, %v26
  %v31 = vunpack.c.l.b16 %v22
  %v32 = vunpack.c.l.b16 %v23
  %v33 = vpack.c.b16 %v32, %v31
  %vm35 = vcmask 130048
  %v37 = vsel %vm35, %v28, 0
  %39 = vmatpush.bf16.msra.mxu0 0
  %40 = vmatpush.bf16.msra.mxu0 0
  %41 = vmatpush.bf16.msra.mxu0 0
  %42 = vmatpush.bf16.msra.mxu0 0
  %43 = vmatpush.bf16.msra.mxu0 0
  %44 = vmatpush.bf16.msra.mxu0 0
  %45 = vmatpush.bf16.msra.mxu0 0
  %46 = vmatpush.bf16.msra.mxu0 %v33
  %47 = vmatmul.bf16.gmra.mxu0 %v37
  %v48 = vpop.f32.mrf.mxu0
  %v49 = vadd.f32 0.0, %v48
  %v50 = vpop.f32.mrf.mxu0
  %v51 = vadd.f32 0.0, %v50
  %52 = vdwg.mxu0
  %v53 = vld [vmem:[%s2] sm:$0xf]
  %v54 = vld [vmem:[%s2 + $0x4] sm:$0xf]
  %v55 = vpack.c.bf16 %v51, %v49
  %v58 = vunpack.c.l.b16 %v53
  %v59 = vunpack.c.l.b16 %v54
  %v60 = vpack.c.b16 %v59, %v58
  %v62 = vsel %vm35, %v60, 0
  %64 = vmatpush.bf16.msra.mxu0 0
  %65 = vmatpush.bf16.msra.mxu0 0
  %66 = vmatpush.bf16.msra.mxu0 0
  %67 = vmatpush.bf16.msra.mxu0 0
  %68 = vmatpush.bf16.msra.mxu0 0
  %69 = vmatpush.bf16.msra.mxu0 0
  %70 = vmatpush.bf16.msra.mxu0 0
  %71 = vmatpush.bf16.msra.mxu0 %v55
  %72 = vmatmul.bf16.gmra.mxu0 %v62
  %v73 = vpop.f32.mrf.mxu0
  %v74 = vadd.f32 0.0, %v73
  %v75 = vpop.f32.mrf.mxu0
  %v76 = vadd.f32 0.0, %v75
  %77 = vdwg.mxu0
  %v78 = vadd.f32 %v20, %v74
  %v79 = vadd.f32 %v21, %v76
  %s80 = scalar_lea.vmem %s1, 8
  %v81 = vld [vmem:[%s80] sm:$0xf]
  %v82 = vld [vmem:[%s80 + $0x4] sm:$0xf]
  %v85 = vunpack.c.l.b16 %v81
  %v86 = vunpack.c.l.b16 %v82
  %v87 = vpack.c.b16 %v86, %v85
  %89 = vmatpush.bf16.msra.mxu0 0
  %90 = vmatpush.bf16.msra.mxu0 0
  %91 = vmatpush.bf16.msra.mxu0 0
  %92 = vmatpush.bf16.msra.mxu0 0
  %93 = vmatpush.bf16.msra.mxu0 0
  %94 = vmatpush.bf16.msra.mxu0 0
  %95 = vmatpush.bf16.msra.mxu0 0
  %96 = vmatpush.bf16.msra.mxu0 %v87
  %97 = vmatmul.bf16.gmra.mxu0 %v37
  %v98 = vpop.f32.mrf.mxu0
  %v99 = vadd.f32 0.0, %v98
  %v100 = vpop.f32.mrf.mxu0
  %v101 = vadd.f32 0.0, %v100
  %102 = vdwg.mxu0
  %s103 = scalar_lea.vmem %s2, 8
  %v104 = vld [vmem:[%s103] sm:$0xf]
  %v105 = vld [vmem:[%s103 + $0x4] sm:$0xf]
  %v106 = vpack.c.bf16 %v101, %v99
  %v109 = vunpack.c.l.b16 %v104
  %v110 = vunpack.c.l.b16 %v105
  %v111 = vpack.c.b16 %v110, %v109
  %v113 = vsel %vm35, %v111, 0
  %115 = vmatpush.bf16.msra.mxu0 0
  %116 = vmatpush.bf16.msra.mxu0 0
  %117 = vmatpush.bf16.msra.mxu0 0
  %118 = vmatpush.bf16.msra.mxu0 0
  %119 = vmatpush.bf16.msra.mxu0 0
  %120 = vmatpush.bf16.msra.mxu0 0
  %121 = vmatpush.bf16.msra.mxu0 0
  %122 = vmatpush.bf16.msra.mxu0 %v106
  %123 = vmatmul.bf16.gmra.mxu0 %v113
  %v124 = vpop.f32.mrf.mxu0
  %v125 = vadd.f32 0.0, %v124
  %v126 = vpop.f32.mrf.mxu0
  %v127 = vadd.f32 0.0, %v126
  %128 = vdwg.mxu0
  %v129 = vadd.f32 %v78, %v125
  %v130 = vadd.f32 %v79, %v127
  %s131 = scalar_lea.vmem %s1, 16
  %v132 = vld [vmem:[%s131] sm:$0xf]
  %v133 = vld [vmem:[%s131 + $0x4] sm:$0xf]
  %v136 = vunpack.c.l.b16 %v132
  %v137 = vunpack.c.l.b16 %v133
  %v138 = vpack.c.b16 %v137, %v136
  %140 = vmatpush.bf16.msra.mxu0 0
  %141 = vmatpush.bf16.msra.mxu0 0
  %142 = vmatpush.bf16.msra.mxu0 0
  %143 = vmatpush.bf16.msra.mxu0 0
  %144 = vmatpush.bf16.msra.mxu0 0
  %145 = vmatpush.bf16.msra.mxu0 0
  %146 = vmatpush.bf16.msra.mxu0 0
  %147 = vmatpush.bf16.msra.mxu0 %v138
  %148 = vmatmul.bf16.gmra.mxu0 %v37
  %v149 = vpop.f32.mrf.mxu0
  %v150 = vadd.f32 0.0, %v149
  %v151 = vpop.f32.mrf.mxu0
  %v152 = vadd.f32 0.0, %v151
  %153 = vdwg.mxu0
  %s154 = scalar_lea.vmem %s2, 16
  %v155 = vld [vmem:[%s154] sm:$0xf]
  %v156 = vld [vmem:[%s154 + $0x4] sm:$0xf]
  %v157 = vpack.c.bf16 %v152, %v150
  %v160 = vunpack.c.l.b16 %v155
  %v161 = vunpack.c.l.b16 %v156
  %v162 = vpack.c.b16 %v161, %v160
  %v164 = vsel %vm35, %v162, 0
  %166 = vmatpush.bf16.msra.mxu0 0
  %167 = vmatpush.bf16.msra.mxu0 0
  %168 = vmatpush.bf16.msra.mxu0 0
  %169 = vmatpush.bf16.msra.mxu0 0
  %170 = vmatpush.bf16.msra.mxu0 0
  %171 = vmatpush.bf16.msra.mxu0 0
  %172 = vmatpush.bf16.msra.mxu0 0
  %173 = vmatpush.bf16.msra.mxu0 %v157
  %174 = vmatmul.bf16.gmra.mxu0 %v164
  %v175 = vpop.f32.mrf.mxu0
  %v176 = vadd.f32 0.0, %v175
  %v177 = vpop.f32.mrf.mxu0
  %v178 = vadd.f32 0.0, %v177
  %179 = vdwg.mxu0
  %v180 = vadd.f32 %v129, %v176
  %v181 = vadd.f32 %v130, %v178
  %182 = vst [vmem:[%s4] sm:$0xff] %v180
  %183 = vst [vmem:[%s4 + $0x8] sm:$0xff] %v181
  // Predicated region
  $region18: #{cheb_conv_forward.1} parent=0 // pred_check
    _
  $region19: #{cheb_conv_forward.1} parent=0 // pred_check_branch
    %185 = sbr.rel (0) target = $region21
  $region20: #{cheb_conv_forward.1} parent=0 // pred_region
    _
  $region21: #{cheb_conv_forward.1} parent=0 // pred_fallthru
    _
  // Predicated region
  $region22: #{cheb_conv_forward.1} parent=0 // pred_check
    _
  $region23: #{cheb_conv_forward.1} parent=0 // pred_check_branch
    %187 = sbr.rel (0) target = $region25
  $region24: #{cheb_conv_forward.1} parent=0 // pred_region
    _
  $region25: #{cheb_conv_forward.1} parent=0 // pred_fallthru
    _

</llo_original>
